<compile_context>
chip_gen: v5e
topology: v5e:2x2
jax: 0.10.0
libtpu: 0.0.40
codegen_flags: <defaults>
</compile_context>

<pallas_src>
import functools

import jax
import jax.numpy as jnp
from jax.experimental import pallas as pl
from jax.experimental.pallas import tpu as pltpu

_LANES = 128      # vreg lane width
_SUBLANES = 8     # vreg sublane count (f32)


def _multi_loss_kernel(slab_ref, out_ref, *, rows_per_field):
    """slab_ref: (rows_padded, 128) f32 VMEM; out_ref: (1, 1) f32 SMEM."""
    R = rows_per_field
    slab = slab_ref[...]                  # one aligned (8k, 128) load
    ls = slab[0:R, :]                     # losses   (zero-padded lanes)
    lv = slab[R:2 * R, :]                 # log_vars (zero-padded lanes)
    # Padded lanes are exactly neutral: exp(-0) * 0 + 0 == 0.
    combined = jnp.exp(-lv) * ls + lv
    out_ref[0, 0] = jnp.sum(combined)     # scalar store to SMEM


def _forward_pallas(loss_values, log_vars):
    """loss_values, log_vars: (loss_num,) f32 -> scalar f32 via one Pallas call."""
    loss_num = loss_values.shape[0]
    padded = pl.cdiv(loss_num, _LANES) * _LANES        # lane-padded length
    R = padded // _LANES                                # rows per field
    rows = 2 * R
    rows_padded = pl.cdiv(rows, _SUBLANES) * _SUBLANES  # sublane-aligned slab height

    ls = jnp.pad(loss_values.astype(jnp.float32), (0, padded - loss_num)).reshape(R, _LANES)
    lv = jnp.pad(log_vars.astype(jnp.float32), (0, padded - loss_num)).reshape(R, _LANES)
    slab = jnp.concatenate([ls, lv], axis=0)
    if rows_padded > rows:
        slab = jnp.pad(slab, ((0, rows_padded - rows), (0, 0)))

    out = pl.pallas_call(
        functools.partial(_multi_loss_kernel, rows_per_field=R),
        out_shape=jax.ShapeDtypeStruct((1, 1), jnp.float32),
        in_specs=[pl.BlockSpec(memory_space=pltpu.MemorySpace.VMEM)],
        out_specs=pl.BlockSpec(memory_space=pltpu.MemorySpace.SMEM),
        cost_estimate=pl.CostEstimate(
            flops=4 * padded,
            transcendentals=padded,
            bytes_accessed=rows_padded * _LANES * 4 + 4,
        ),
    )(slab)
    return out[0, 0]


@jax.custom_vjp
def custom_multi_loss(loss_values, log_vars):
    """Uncertainty-weighted multi-task loss: sum(exp(-lv) * loss + lv)."""
    return _forward_pallas(loss_values, log_vars)


def _custom_multi_loss_fwd(loss_values, log_vars):
    return _forward_pallas(loss_values, log_vars), (loss_values, log_vars)


def _custom_multi_loss_bwd(residuals, g):
    loss_values, log_vars = residuals
    lv = log_vars.astype(jnp.float32)
    ls = loss_values.astype(jnp.float32)
    precision = jnp.exp(-lv)
    d_loss = (g * precision).astype(loss_values.dtype)
    d_lv = (g * (1.0 - precision * ls)).astype(log_vars.dtype)
    return d_loss, d_lv


custom_multi_loss.defvjp(_custom_multi_loss_fwd, _custom_multi_loss_bwd)


class CustomMultiLossLayer:
    """JAX/Pallas equivalent of the PyTorch CustomMultiLossLayer."""

    def __init__(self, loss_num):
        self.loss_num = loss_num
        # nn.Parameter(torch.zeros(loss_num)) -> zero init; register with your
        # training framework of choice to make it trainable (custom_vjp above
        # supplies the analytic gradient).
        self.log_vars = jnp.zeros((loss_num,), dtype=jnp.float32)

    def __call__(self, loss_list):
        # Prefer an already-packed (loss_num,) array; a Python list/tuple of
        # scalar losses is packed with a single jnp.asarray (no per-element HLOs).
        if isinstance(loss_list, (list, tuple)):
            loss_values = jnp.asarray(loss_list, dtype=jnp.float32)
        else:
            loss_values = jnp.asarray(loss_list, dtype=jnp.float32).reshape(-1)
        return custom_multi_loss(loss_values, self.log_vars)


if __name__ == "__main__":
    loss_num = 4
    key = jax.random.PRNGKey(0)

    # Deterministic synthetic per-task losses (e.g. outputs of 4 loss heads).
    loss_vec = jax.random.uniform(key, (loss_num,), dtype=jnp.float32) * 2.0
    loss_list = list(loss_vec)

    layer = CustomMultiLossLayer(loss_num)
    # Non-trivial log_vars so the exp path is exercised (still deterministic).
    layer.log_vars = jnp.linspace(-0.5, 0.5, loss_num, dtype=jnp.float32)

    result = jax.block_until_ready(layer(loss_list))

    # Pure-JAX forward reference check.
    lv = layer.log_vars
    ls = jnp.asarray(loss_list, dtype=jnp.float32)
    ref = jnp.sum(jnp.exp(-lv) * ls + lv)
    assert jnp.allclose(result, ref, rtol=1e-6, atol=1e-6), (result, ref)

    # Gradient check (custom_vjp): d loss / d log_vars = 1 - exp(-lv) * loss.
    grads = jax.block_until_ready(
        jax.grad(lambda params: custom_multi_loss(ls, params))(lv)
    )
    ref_grads = 1.0 - jnp.exp(-lv) * ls
    assert jnp.allclose(grads, ref_grads, rtol=1e-6, atol=1e-6), (grads, ref_grads)

    print("KERNEL_OK")
</pallas_src>

<mosaic_0001>
module attributes {stable_mosaic.version = 11 : i64} {
  func.func @_multi_loss_kernel(%arg0: memref<8x128xf32, #tpu.memory_space<vmem>>, %arg1: memref<1x1xf32, #tpu.memory_space<smem>>) attributes {dimension_semantics = [], scalar_prefetch = 0 : i64, scratch_operands = 0 : i64, tpu.core_type = #tpu.core_type<tc>} {
    %c0 = arith.constant 0 : index
    %c0_0 = arith.constant 0 : index
    %0 = vector.load %arg0[%c0, %c0_0] : memref<8x128xf32, #tpu.memory_space<vmem>>, vector<8x128xf32>
    %1 = vector.extract_strided_slice %0 {offsets = [0, 0], sizes = [1, 128], strides = [1, 1]} : vector<8x128xf32> to vector<1x128xf32>
    %2 = vector.extract_strided_slice %0 {offsets = [1, 0], sizes = [1, 128], strides = [1, 1]} : vector<8x128xf32> to vector<1x128xf32>
    %cst = arith.constant 0.000000e+00 : f32
    %3 = vector.broadcast %cst : f32 to vector<1x128xf32>
    %4 = arith.subf %3, %2 : vector<1x128xf32>
    %5 = math.exp %4 : vector<1x128xf32>
    %6 = arith.mulf %5, %1 : vector<1x128xf32>
    %7 = arith.addf %6, %2 : vector<1x128xf32>
    %8 = vector.shape_cast %7 : vector<1x128xf32> to vector<1x1x128xf32>
    %cst_1 = arith.constant dense<0.000000e+00> : vector<1xf32>
    %9 = vector.multi_reduction <add>, %8, %cst_1 [1, 2] : vector<1x1x128xf32> to vector<1xf32>
    %10 = vector.shape_cast %9 : vector<1xf32> to vector<1x1x1xf32>
    %11 = vector.extract %10[0, 0, 0] : f32 from vector<1x1x1xf32>
    %c0_2 = arith.constant 0 : index
    %c0_3 = arith.constant 0 : index
    %12 = memref.load %arg1[%c0_2, %c0_3] : memref<1x1xf32, #tpu.memory_space<smem>>
    memref.store %11, %arg1[%c0_2, %c0_3] : memref<1x1xf32, #tpu.memory_space<smem>>
    return
  }
}

</mosaic_0001>

<llo_original>
// kernel: tpu_custom_call.1
$region0: #{tpu_custom_call.1}
  #allocation0 [shape = 'u32[]', space=smem, size = 0x4, offset = 0x4, fixed_abs, tag = 'smem constant byte address 0x4 - core index']
  #allocation1 [shape = 'u32[72,128]{1,0:T(1,128)}', space=vmem, size = 0x9000, scoped, tag = 'internal scratch']
  %s0 = inlined_call_operand.hbm [shape: f32[8,128], index: 0, kind: input, shape index: {}]
  %s1 = inlined_call_operand.hbm [shape: f32[1,1], index: 1, kind: output, shape index: {}]
  %s2 = sld [smem:[#allocation0]]
  $region18: #{tpu_custom_call.1} parent=0
    _
  %s4 = ssub.s32 1, %s2
  %s5 = scalar_select 0, %s4, %s2
  $region1: #{tpu_custom_call.1} parent=0
    #allocation2 [shape = 'u8[4096]{0}', space=vmem, size = 0x1000, scoped, tag = 'input window, operand 0, single buffered']
    #allocation3 [shape = 's32[1]{0}', space=sflag, size = 0x4, scoped, tag = 'scoped memory for tpu_custom_call.1']
    #allocation4 [shape = 's32[1]{0}', space=sflag, size = 0x4, scoped, tag = 'scoped memory for tpu_custom_call.1']
    #allocation5 [shape = 'u8[512]{0}', space=smem, size = 0x200, scoped, tag = 'output window, operand 0, single buffered']
    %6 = vsyncpa [#allocation3], 0
    %7 = vsyncpa [#allocation4], 0
    // Predicated region
    $region2: #{tpu_custom_call.1} parent=1 // pred_check
      _
    $region3: #{tpu_custom_call.1} parent=1 // pred_check_branch
      %9 = sbr.rel (0) target = $region5
    $region4: #{tpu_custom_call.1} parent=1 // pred_region
      %11 = vsyncadd [#allocation3], 0
      %s13 = sshll.u32 %s0, 4
      %s14 = int_to_ptr.hbm [resolvable:$true] %s13
      %s15 = sshll.u32 [#allocation2], 4
      %s16 = int_to_ptr.vmem [resolvable:$true] %s15
      %18 = dma.hbm_to_vmem [thread:$0]  %s14, 128, %s16, [#allocation3]
    $region5: #{tpu_custom_call.1} parent=1 // pred_fallthru
      _
    // Predicated region
    $region6: #{tpu_custom_call.1} parent=1 // pred_check
      _
    $region7: #{tpu_custom_call.1} parent=1 // pred_check_branch
      %20 = sbr.rel (0) target = $region9
    $region8: #{tpu_custom_call.1} parent=1 // pred_region
      %22 = dma.done [#allocation3], 128
    $region9: #{tpu_custom_call.1} parent=1 // pred_fallthru
      _
    %v23 = vld [vmem:[#allocation2] sm:$0xff]
    %v24 = vsub.f32 0.0, %v23
    %v25 = vmul.f32 %v24, 1.442695
    %v26 = vpow.pop %v25
    %v28 = vrot.slane %v23, 7
    %v30 = vmul.f32 %v26, %v28
    %v31 = vadd.f32 %v30, %v23
    %v33 = vrot.slane %v31, 1
    %vm35 = vcmask 1040384
    %v36 = vsel %vm35, %v33, 0.0
    %37 = vadd.xlane.f32.xlu0 %v36
    %v38 = vpop.xlane.xlu0 %37
    %v39 = vrot.slane %v38, 4
    %v40 = vadd.f32 %v38, %v39
    %v41 = vrot.slane %v40, 2
    %v42 = vadd.f32 %v40, %v41
    %v43 = vrot.slane %v42, 1
    %v44 = vadd.f32 %v42, %v43
    %s45 = vtos %v44
    %s46 = scalar_lea.smem [#allocation5], 0
    %47 = sst [smem:[%s46]] %s45
    // Predicated region
    $region10: #{tpu_custom_call.1} parent=1 // pred_check
      _
    $region11: #{tpu_custom_call.1} parent=1 // pred_check_branch
      %49 = sbr.rel (0) target = $region13
    $region12: #{tpu_custom_call.1} parent=1 // pred_region
      %51 = vsyncadd [#allocation4], 0
      %s53 = sshll.u32 %s1, 4
      %s54 = int_to_ptr.hbm [resolvable:$true] %s53
      %56 = dma.smem_to_hbm [#allocation5], 16, %s54, [#allocation4]
    $region13: #{tpu_custom_call.1} parent=1 // pred_fallthru
      _
    // Predicated region
    $region14: #{tpu_custom_call.1} parent=1 // pred_check
      _
    $region15: #{tpu_custom_call.1} parent=1 // pred_check_branch
      %58 = sbr.rel (0) target = $region17
    $region16: #{tpu_custom_call.1} parent=1 // pred_region
      %60 = dma.done [#allocation4], 16
    $region17: #{tpu_custom_call.1} parent=1 // pred_fallthru
      _
    %61 = sfence
    %62 = vsyncpa [#allocation3], 1
    %63 = vsyncpa [#allocation4], 1

</llo_original>
